<compile_context>
chip_gen: v7x
topology: tpu7x:2x2x1
jax: 0.10.0
libtpu: 0.0.40
codegen_flags: <defaults>
</compile_context>

<pallas_src>
import jax
import jax.numpy as jnp
from jax.experimental import pallas as pl
from jax.experimental.pallas import tpu as pltpu


def _mlp_kernel(x_ref,
                w1_ref, b1_ref,
                w2_ref, b2_ref,
                w3_ref, b3_ref,
                w4_ref, b4_ref,
                o_ref):
    """Fused forward pass for one batch tile, (features, batch) layout."""
    x = x_ref[...]                                                # (1, tb) f32

    # Layer 1 (1 -> 32): K = 1 -> outer product -> VPU broadcast multiply.
    h = jnp.maximum(w1_ref[...] * x + b1_ref[...], 0.0)          # (32, tb) f32

    # Layer 2 (32 -> 64): MXU, bf16 operands, f32 accumulation, batch on N.
    h = jnp.dot(w2_ref[...], h.astype(jnp.bfloat16),
                preferred_element_type=jnp.float32) + b2_ref[...]
    h = jnp.maximum(h, 0.0)                                       # (64, tb) f32

    # Layer 3 (64 -> 128): MXU, bf16 operands, f32 accumulation.
    h = jnp.dot(w3_ref[...], h.astype(jnp.bfloat16),
                preferred_element_type=jnp.float32) + b3_ref[...]
    h = jnp.maximum(h, 0.0)                                       # (128, tb) f32

    # Layer 4 (128 -> 1): M = 1, keep it OFF the MXU.  VPU multiply with the
    # (128,1) weight column + XLU sublane reduction (both slots are idle).
    logits = jnp.sum(w4_ref[...] * h, axis=0, keepdims=True) + b4_ref[...]

    # Exact sigmoid via one EUP tanh: sigmoid(z) = 0.5 * tanh(z/2) + 0.5.
    o_ref[...] = 0.5 * jnp.tanh(0.5 * logits) + 0.5               # (1, tb) f32


def _num_tensorcores():
    """2 TensorCores per device on v4/v5p (megacore) and v7x, else 1."""
    try:
        kind = jax.devices()[0].device_kind.lower()
    except Exception:
        return 1
    return 2 if any(tag in kind for tag in ("v4", "v5p", "v7")) else 1


def similarity_network_forward(x, params, *, tb_max=8192):
    """x: (B, 1), (B,) or (1, B) float32.  Returns (B, 1) float32 in [0, 1]."""
    (w1, b1), (w2, b2), (w3, b3), (w4, b4) = params

    # Accept lane-major inputs without a wrapper transpose.
    if x.ndim == 2 and x.shape[1] == 1:
        row = x[:, 0]
    elif x.ndim == 2 and x.shape[0] == 1:
        row = x[0]
    else:
        row = x.reshape(-1)
    B = row.shape[0]

    ncores = _num_tensorcores()

    # Pad only the ragged tail: lane-align to 128 (x ncores so a dual-TC chip
    # can split the grid evenly).
    align = 128 * ncores
    Bp = max(align, ((B + align - 1) // align) * align)
    xt = jnp.pad(row.astype(jnp.float32), (0, Bp - B))[None, :]   # (1, Bp)

    # Largest lane-aligned tile dividing Bp; one grid step on 1-TC chips
    # (v5e/v6e), >= ncores steps on multi-TC chips (v7x).
    tb = min(tb_max, Bp // ncores)
    tb = max(128, (tb // 128) * 128)
    while Bp % tb != 0:
        tb -= 128
    grid = (Bp // tb,)

    # MXU operands in bf16; everything else (biases, layer-1/4 weights) f32.
    w2b = w2.astype(jnp.bfloat16)
    w3b = w3.astype(jnp.bfloat16)
    w4col = w4.reshape(-1, 1)                                     # (128, 1) f32

    def _resident(arr):
        return pl.BlockSpec(arr.shape, lambda i: (0, 0))

    grid_spec = pltpu.PrefetchScalarGridSpec(
        num_scalar_prefetch=0,
        grid=grid,
        in_specs=[
            pl.BlockSpec((1, tb), lambda i: (0, i)),              # lane-dense x
            _resident(w1), _resident(b1),
            _resident(w2b), _resident(b2),
            _resident(w3b), _resident(b3),
            _resident(w4col), _resident(b4),
        ],
        out_specs=pl.BlockSpec((1, tb), lambda i: (0, i)),        # lane-dense out
    )

    out = pl.pallas_call(
        _mlp_kernel,
        out_shape=jax.ShapeDtypeStruct((1, Bp), jnp.float32),
        grid_spec=grid_spec,
        compiler_params=pltpu.CompilerParams(
            dimension_semantics=("parallel",),
            vmem_limit_bytes=32 * 1024 * 1024),
    )(xt, w1, b1, w2b, b2, w3b, b3, w4col, b4)

    return out[0, :B][:, None]                                    # (B, 1)


def init_params(key):
    """Deterministic init; PyTorch nn.Linear layout: W (out, in), b (out, 1)."""
    dims = [(1, 32), (32, 64), (64, 128), (128, 1)]
    params = []
    for fan_in, fan_out in dims:
        key, kw, kb = jax.random.split(key, 3)
        bound = 1.0 / (fan_in ** 0.5)
        w = jax.random.uniform(kw, (fan_out, fan_in), jnp.float32, -bound, bound)
        b = jax.random.uniform(kb, (fan_out, 1), jnp.float32, -bound, bound)
        params.append((w, b))
    return params


def reference_forward(x, params):
    """Pure-JAX f32 reference with PyTorch semantics: h = h @ W.T + b."""
    h = x
    for i, (w, b) in enumerate(params):
        h = h @ w.T + b[:, 0]
        if i < len(params) - 1:
            h = jnp.maximum(h, 0.0)
    return jax.nn.sigmoid(h)


if __name__ == "__main__":
    key = jax.random.PRNGKey(0)
    key, kx = jax.random.split(key)

    params = init_params(key)

    B = 500                        # exercises ragged-tail padding
    x = jax.random.normal(kx, (B, 1), jnp.float32)

    out = similarity_network_forward(x, params)
    out = jax.block_until_ready(out)

    ref = reference_forward(x, params)
    assert out.shape == (B, 1)
    # bf16 MXU operands (f32 accumulation) -> small deviation from the f32 ref.
    assert jnp.allclose(out, ref, atol=5e-3, rtol=5e-3), "mismatch vs reference"

    print("KERNEL_OK")
</pallas_src>

<mosaic_0001>
module attributes {stable_mosaic.version = 11 : i64} {
  func.func @_mlp_kernel(%arg0: i32, %arg1: memref<1x512xf32, #tpu.memory_space<vmem>>, %arg2: memref<32x1xf32, #tpu.memory_space<vmem>>, %arg3: memref<32x1xf32, #tpu.memory_space<vmem>>, %arg4: memref<64x32xbf16, #tpu.memory_space<vmem>>, %arg5: memref<64x1xf32, #tpu.memory_space<vmem>>, %arg6: memref<128x64xbf16, #tpu.memory_space<vmem>>, %arg7: memref<128x1xf32, #tpu.memory_space<vmem>>, %arg8: memref<128x1xf32, #tpu.memory_space<vmem>>, %arg9: memref<1x1xf32, #tpu.memory_space<vmem>>, %arg10: memref<1x512xf32, #tpu.memory_space<vmem>>) attributes {dimension_semantics = [#tpu.dimension_semantics<parallel>], iteration_bounds = array<i64: 1>, scalar_prefetch = 0 : i64, scratch_operands = 0 : i64, tpu.core_type = #tpu.core_type<tc>, window_params = [{transform_indices = @transform_0, window_bounds = array<i64: 1, 512>}, {pipeline_mode = #tpu.pipeline_mode<synchronous>, transform_indices = @transform_1, window_bounds = array<i64: 32, 1>}, {pipeline_mode = #tpu.pipeline_mode<synchronous>, transform_indices = @transform_2, window_bounds = array<i64: 32, 1>}, {pipeline_mode = #tpu.pipeline_mode<synchronous>, transform_indices = @transform_3, window_bounds = array<i64: 64, 32>}, {pipeline_mode = #tpu.pipeline_mode<synchronous>, transform_indices = @transform_4, window_bounds = array<i64: 64, 1>}, {pipeline_mode = #tpu.pipeline_mode<synchronous>, transform_indices = @transform_5, window_bounds = array<i64: 128, 64>}, {pipeline_mode = #tpu.pipeline_mode<synchronous>, transform_indices = @transform_6, window_bounds = array<i64: 128, 1>}, {pipeline_mode = #tpu.pipeline_mode<synchronous>, transform_indices = @transform_7, window_bounds = array<i64: 128, 1>}, {pipeline_mode = #tpu.pipeline_mode<synchronous>, transform_indices = @transform_8, window_bounds = array<i64: 1, 1>}, {transform_indices = @transform_9, window_bounds = array<i64: 1, 512>}]} {
    %c0 = arith.constant 0 : index
    %c0_0 = arith.constant 0 : index
    %0 = vector.load %arg1[%c0, %c0_0] : memref<1x512xf32, #tpu.memory_space<vmem>>, vector<1x512xf32>
    %c0_1 = arith.constant 0 : index
    %c0_2 = arith.constant 0 : index
    %1 = vector.load %arg2[%c0_1, %c0_2] : memref<32x1xf32, #tpu.memory_space<vmem>>, vector<32x1xf32>
    %2 = vector.broadcast %1 : vector<32x1xf32> to vector<32x512xf32>
    %3 = vector.broadcast %0 : vector<1x512xf32> to vector<32x512xf32>
    %4 = arith.mulf %2, %3 : vector<32x512xf32>
    %c0_3 = arith.constant 0 : index
    %c0_4 = arith.constant 0 : index
    %5 = vector.load %arg3[%c0_3, %c0_4] : memref<32x1xf32, #tpu.memory_space<vmem>>, vector<32x1xf32>
    %6 = vector.broadcast %5 : vector<32x1xf32> to vector<32x512xf32>
    %7 = arith.addf %4, %6 : vector<32x512xf32>
    %cst = arith.constant 0.000000e+00 : f32
    %8 = vector.broadcast %cst : f32 to vector<32x512xf32>
    %9 = arith.maximumf %7, %8 : vector<32x512xf32>
    %c0_5 = arith.constant 0 : index
    %c0_6 = arith.constant 0 : index
    %10 = vector.load %arg4[%c0_5, %c0_6] : memref<64x32xbf16, #tpu.memory_space<vmem>>, vector<64x32xbf16>
    %11 = arith.truncf %9 : vector<32x512xf32> to vector<32x512xbf16>
    %cst_7 = arith.constant dense<0.000000e+00> : vector<64x512xf32>
    %12 = tpu.matmul %10, %11, %cst_7 {dimension_numbers = #tpu.dot_dimension_numbers<[1], [0], [0], [1], [0, 0, 1, 1], [], []>} : vector<64x32xbf16>, vector<32x512xbf16>, vector<64x512xf32> -> vector<64x512xf32>
    %c0_8 = arith.constant 0 : index
    %c0_9 = arith.constant 0 : index
    %13 = vector.load %arg5[%c0_8, %c0_9] : memref<64x1xf32, #tpu.memory_space<vmem>>, vector<64x1xf32>
    %14 = vector.broadcast %13 : vector<64x1xf32> to vector<64x512xf32>
    %15 = arith.addf %12, %14 : vector<64x512xf32>
    %cst_10 = arith.constant 0.000000e+00 : f32
    %16 = vector.broadcast %cst_10 : f32 to vector<64x512xf32>
    %17 = arith.maximumf %15, %16 : vector<64x512xf32>
    %c0_11 = arith.constant 0 : index
    %c0_12 = arith.constant 0 : index
    %18 = vector.load %arg6[%c0_11, %c0_12] : memref<128x64xbf16, #tpu.memory_space<vmem>>, vector<128x64xbf16>
    %19 = arith.truncf %17 : vector<64x512xf32> to vector<64x512xbf16>
    %cst_13 = arith.constant dense<0.000000e+00> : vector<128x512xf32>
    %20 = tpu.matmul %18, %19, %cst_13 {dimension_numbers = #tpu.dot_dimension_numbers<[1], [0], [0], [1], [0, 0, 1, 1], [], []>} : vector<128x64xbf16>, vector<64x512xbf16>, vector<128x512xf32> -> vector<128x512xf32>
    %c0_14 = arith.constant 0 : index
    %c0_15 = arith.constant 0 : index
    %21 = vector.load %arg7[%c0_14, %c0_15] : memref<128x1xf32, #tpu.memory_space<vmem>>, vector<128x1xf32>
    %22 = vector.broadcast %21 : vector<128x1xf32> to vector<128x512xf32>
    %23 = arith.addf %20, %22 : vector<128x512xf32>
    %cst_16 = arith.constant 0.000000e+00 : f32
    %24 = vector.broadcast %cst_16 : f32 to vector<128x512xf32>
    %25 = arith.maximumf %23, %24 : vector<128x512xf32>
    %c0_17 = arith.constant 0 : index
    %c0_18 = arith.constant 0 : index
    %26 = vector.load %arg8[%c0_17, %c0_18] : memref<128x1xf32, #tpu.memory_space<vmem>>, vector<128x1xf32>
    %27 = vector.broadcast %26 : vector<128x1xf32> to vector<128x512xf32>
    %28 = arith.mulf %27, %25 : vector<128x512xf32>
    %cst_19 = arith.constant dense<0.000000e+00> : vector<512xf32>
    %29 = vector.multi_reduction <add>, %28, %cst_19 [0] : vector<128x512xf32> to vector<512xf32>
    %30 = vector.shape_cast %29 : vector<512xf32> to vector<1x512xf32>
    %c0_20 = arith.constant 0 : index
    %c0_21 = arith.constant 0 : index
    %31 = vector.load %arg9[%c0_20, %c0_21] : memref<1x1xf32, #tpu.memory_space<vmem>>, vector<1x1xf32>
    %32 = vector.broadcast %31 : vector<1x1xf32> to vector<1x512xf32>
    %33 = arith.addf %30, %32 : vector<1x512xf32>
    %cst_22 = arith.constant 5.000000e-01 : f32
    %34 = vector.broadcast %cst_22 : f32 to vector<1x512xf32>
    %35 = arith.mulf %34, %33 : vector<1x512xf32>
    %36 = math.tanh %35 : vector<1x512xf32>
    %cst_23 = arith.constant 5.000000e-01 : f32
    %37 = vector.broadcast %cst_23 : f32 to vector<1x512xf32>
    %38 = arith.mulf %37, %36 : vector<1x512xf32>
    %cst_24 = arith.constant 5.000000e-01 : f32
    %39 = vector.broadcast %cst_24 : f32 to vector<1x512xf32>
    %40 = arith.addf %38, %39 : vector<1x512xf32>
    %c0_25 = arith.constant 0 : index
    %c0_26 = arith.constant 0 : index
    %41 = vector.load %arg10[%c0_25, %c0_26] : memref<1x512xf32, #tpu.memory_space<vmem>>, vector<1x512xf32>
    tpu.vector_store %arg10[%c0_25, %c0_26], %40 {strides = array<i32>} : memref<1x512xf32, #tpu.memory_space<vmem>>, vector<1x512xf32>,
    return
  }
  func.func @transform_0(%arg0: i32) -> (i32, i32) {
    %c0_i32 = arith.constant 0 : i32
    %c0_i32_0 = arith.constant 0 : i32
    return %c0_i32, %arg0 : i32, i32
  }
  func.func @transform_1(%arg0: i32) -> (i32, i32) {
    %c0_i32 = arith.constant 0 : i32
    %c0_i32_0 = arith.constant 0 : i32
    %c0_i32_1 = arith.constant 0 : i32
    return %c0_i32, %c0_i32_0 : i32, i32
  }
  func.func @transform_2(%arg0: i32) -> (i32, i32) {
    %c0_i32 = arith.constant 0 : i32
    %c0_i32_0 = arith.constant 0 : i32
    %c0_i32_1 = arith.constant 0 : i32
    return %c0_i32, %c0_i32_0 : i32, i32
  }
  func.func @transform_3(%arg0: i32) -> (i32, i32) {
    %c0_i32 = arith.constant 0 : i32
    %c0_i32_0 = arith.constant 0 : i32
    %c0_i32_1 = arith.constant 0 : i32
    return %c0_i32, %c0_i32_0 : i32, i32
  }
  func.func @transform_4(%arg0: i32) -> (i32, i32) {
    %c0_i32 = arith.constant 0 : i32
    %c0_i32_0 = arith.constant 0 : i32
    %c0_i32_1 = arith.constant 0 : i32
    return %c0_i32, %c0_i32_0 : i32, i32
  }
  func.func @transform_5(%arg0: i32) -> (i32, i32) {
    %c0_i32 = arith.constant 0 : i32
    %c0_i32_0 = arith.constant 0 : i32
    %c0_i32_1 = arith.constant 0 : i32
    return %c0_i32, %c0_i32_0 : i32, i32
  }
  func.func @transform_6(%arg0: i32) -> (i32, i32) {
    %c0_i32 = arith.constant 0 : i32
    %c0_i32_0 = arith.constant 0 : i32
    %c0_i32_1 = arith.constant 0 : i32
    return %c0_i32, %c0_i32_0 : i32, i32
  }
  func.func @transform_7(%arg0: i32) -> (i32, i32) {
    %c0_i32 = arith.constant 0 : i32
    %c0_i32_0 = arith.constant 0 : i32
    %c0_i32_1 = arith.constant 0 : i32
    return %c0_i32, %c0_i32_0 : i32, i32
  }
  func.func @transform_8(%arg0: i32) -> (i32, i32) {
    %c0_i32 = arith.constant 0 : i32
    %c0_i32_0 = arith.constant 0 : i32
    %c0_i32_1 = arith.constant 0 : i32
    return %c0_i32, %c0_i32_0 : i32, i32
  }
  func.func @transform_9(%arg0: i32) -> (i32, i32) {
    %c0_i32 = arith.constant 0 : i32
    %c0_i32_0 = arith.constant 0 : i32
    return %c0_i32, %arg0 : i32, i32
  }
}

</mosaic_0001>

<llo_original>
// kernel: tpu_custom_call.1
$region0: #{tpu_custom_call.1}
  #allocation0 [shape = 'u32[]', space=smem, size = 0x4, offset = 0x4, fixed_abs, tag = 'smem constant byte address 0x4 - core index']
  #allocation1 [shape = 'u32[144,128]{1,0:T(1,128)}', space=vmem, size = 0x12000, scoped, tag = 'internal scratch']
  #allocation2 [shape = 'f32[1,1]{1,0:T(1,128)S(1)}', space=vmem, size = 0x200, scoped, tag = 'scoped memory for tpu_custom_call.1']
  %s0 = inlined_call_operand.vmem [shape: f32[1,512], index: 0, kind: input, shape index: {}]
  %s1 = inlined_call_operand.vmem [shape: f32[32,1], index: 1, kind: input, shape index: {}]
  %s2 = inlined_call_operand.vmem [shape: f32[32,1], index: 2, kind: input, shape index: {}]
  %s3 = inlined_call_operand.vmem [shape: bf16[64,32], index: 3, kind: input, shape index: {}]
  %s4 = inlined_call_operand.vmem [shape: f32[64,1], index: 4, kind: input, shape index: {}]
  %s5 = inlined_call_operand.vmem [shape: bf16[128,64], index: 5, kind: input, shape index: {}]
  %s6 = inlined_call_operand.vmem [shape: f32[128,1], index: 6, kind: input, shape index: {}]
  %s7 = inlined_call_operand.vmem [shape: f32[128,1], index: 7, kind: input, shape index: {}]
  %s8 = inlined_call_operand.<no memory space> [shape: f32[1,1], index: 8, kind: input, shape index: {}]
  %s9 = inlined_call_operand.hbm [shape: f32[1,512], index: 9, kind: output, shape index: {}]
  %s10 = sld [smem:[#allocation0]]
  $region46: #{tpu_custom_call.1} parent=0
    _
  %s12 = ssub.s32 1, %s10
  %s13 = scalar_select 0, %s12, %s10
  %v14 = vstv %s8
  %15 = vst [vmem:[#allocation2] sm:$0x1] %v14
  $region1: #{tpu_custom_call.1} parent=0
    #allocation3 [shape = 'u8[2048]{0}', space=vmem, size = 0x800, scoped, tag = 'output window, operand 0, single buffered']
    #allocation4 [shape = 's32[1]{0}', space=sflag, size = 0x4, scoped, tag = 'scoped memory for tpu_custom_call.1']
    %16 = vsyncpa [#allocation4], 0
    // Predicated region
    $region2: #{tpu_custom_call.1} parent=1 // pred_check
      _
    $region3: #{tpu_custom_call.1} parent=1 // pred_check_branch
      %18 = sbr.rel (0) target = $region5
    $region4: #{tpu_custom_call.1} parent=1 // pred_region
      _
    $region5: #{tpu_custom_call.1} parent=1 // pred_fallthru
      _
    // Predicated region
    $region6: #{tpu_custom_call.1} parent=1 // pred_check
      _
    $region7: #{tpu_custom_call.1} parent=1 // pred_check_branch
      %20 = sbr.rel (0) target = $region9
    $region8: #{tpu_custom_call.1} parent=1 // pred_region
      _
    $region9: #{tpu_custom_call.1} parent=1 // pred_fallthru
      _
    // Predicated region
    $region10: #{tpu_custom_call.1} parent=1 // pred_check
      _
    $region11: #{tpu_custom_call.1} parent=1 // pred_check_branch
      %22 = sbr.rel (0) target = $region13
    $region12: #{tpu_custom_call.1} parent=1 // pred_region
      _
    $region13: #{tpu_custom_call.1} parent=1 // pred_fallthru
      _
    // Predicated region
    $region14: #{tpu_custom_call.1} parent=1 // pred_check
      _
    $region15: #{tpu_custom_call.1} parent=1 // pred_check_branch
      %24 = sbr.rel (0) target = $region17
    $region16: #{tpu_custom_call.1} parent=1 // pred_region
      _
    $region17: #{tpu_custom_call.1} parent=1 // pred_fallthru
      _
    // Predicated region
    $region18: #{tpu_custom_call.1} parent=1 // pred_check
      _
    $region19: #{tpu_custom_call.1} parent=1 // pred_check_branch
      %26 = sbr.rel (0) target = $region21
    $region20: #{tpu_custom_call.1} parent=1 // pred_region
      _
    $region21: #{tpu_custom_call.1} parent=1 // pred_fallthru
      _
    // Predicated region
    $region22: #{tpu_custom_call.1} parent=1 // pred_check
      _
    $region23: #{tpu_custom_call.1} parent=1 // pred_check_branch
      %28 = sbr.rel (0) target = $region25
    $region24: #{tpu_custom_call.1} parent=1 // pred_region
      _
    $region25: #{tpu_custom_call.1} parent=1 // pred_fallthru
      _
    // Predicated region
    $region26: #{tpu_custom_call.1} parent=1 // pred_check
      _
    $region27: #{tpu_custom_call.1} parent=1 // pred_check_branch
      %30 = sbr.rel (0) target = $region29
    $region28: #{tpu_custom_call.1} parent=1 // pred_region
      _
    $region29: #{tpu_custom_call.1} parent=1 // pred_fallthru
      _
    // Predicated region
    $region30: #{tpu_custom_call.1} parent=1 // pred_check
      _
    $region31: #{tpu_custom_call.1} parent=1 // pred_check_branch
      %32 = sbr.rel (0) target = $region33
    $region32: #{tpu_custom_call.1} parent=1 // pred_region
      _
    $region33: #{tpu_custom_call.1} parent=1 // pred_fallthru
      _
    // Predicated region
    $region34: #{tpu_custom_call.1} parent=1 // pred_check
      _
    $region35: #{tpu_custom_call.1} parent=1 // pred_check_branch
      %34 = sbr.rel (0) target = $region37
    $region36: #{tpu_custom_call.1} parent=1 // pred_region
      _
    $region37: #{tpu_custom_call.1} parent=1 // pred_fallthru
      _
    %v36 = vld [vmem:[%s0] sm:$0xf]
    %v37 = vld [vmem:[%s1] sm:$0xff]
    %v38 = vld [vmem:[%s1 + $0x8] sm:$0xff]
    %v39 = vld [vmem:[%s1 + $0x10] sm:$0xff]
    %v40 = vld [vmem:[%s1 + $0x18] sm:$0xff]
    %42 = vset.pattern.permute.xlu0 0
    %43 = vperm.xlu0 %42, %v37
    %v44 = vpop.permute.xlu0 %43
    %47 = vset.pattern.permute.xlu0 0
    %48 = vperm.xlu0 %47, %v38
    %v49 = vpop.permute.xlu0 %48
    %52 = vset.pattern.permute.xlu0 0
    %53 = vperm.xlu0 %52, %v39
    %v54 = vpop.permute.xlu0 %53
    %57 = vset.pattern.permute.xlu0 0
    %58 = vperm.xlu0 %57, %v40
    %v59 = vpop.permute.xlu0 %58
    %v62 = vlaneseq
    %v63 = vshrl.u32 %v62, 7
    %v64 = vsub.s32 0, %v63
    %v65 = vrot.slane %v36, %v64
    %v66 = vlaneseq
    %v67 = vshrl.u32 %v66, 7
    %v68 = vsub.s32 1, %v67
    %v69 = vrot.slane %v36, %v68
    %v70 = vlaneseq
    %v71 = vshrl.u32 %v70, 7
    %v72 = vsub.s32 2, %v71
    %v73 = vrot.slane %v36, %v72
    %v74 = vlaneseq
    %v75 = vshrl.u32 %v74, 7
    %v76 = vsub.s32 3, %v75
    %v77 = vrot.slane %v36, %v76
    %v82 = vmul.f32 %v44, %v65
    %v83 = vmul.f32 %v44, %v69
    %v84 = vmul.f32 %v44, %v73
    %v85 = vmul.f32 %v44, %v77
    %v86 = vmul.f32 %v49, %v65
    %v87 = vmul.f32 %v49, %v69
    %v88 = vmul.f32 %v49, %v73
    %v89 = vmul.f32 %v49, %v77
    %v90 = vmul.f32 %v54, %v65
    %v91 = vmul.f32 %v54, %v69
    %v92 = vmul.f32 %v54, %v73
    %v93 = vmul.f32 %v54, %v77
    %v94 = vmul.f32 %v59, %v65
    %v95 = vmul.f32 %v59, %v69
    %v96 = vmul.f32 %v59, %v73
    %v97 = vmul.f32 %v59, %v77
    %v98 = vld [vmem:[%s2] sm:$0xff]
    %v99 = vld [vmem:[%s2 + $0x8] sm:$0xff]
    %v100 = vld [vmem:[%s2 + $0x10] sm:$0xff]
    %v101 = vld [vmem:[%s2 + $0x18] sm:$0xff]
    %103 = vset.pattern.permute.xlu0 0
    %104 = vperm.xlu0 %103, %v98
    %v105 = vpop.permute.xlu0 %104
    %108 = vset.pattern.permute.xlu0 0
    %109 = vperm.xlu0 %108, %v99
    %v110 = vpop.permute.xlu0 %109
    %113 = vset.pattern.permute.xlu0 0
    %114 = vperm.xlu0 %113, %v100
    %v115 = vpop.permute.xlu0 %114
    %118 = vset.pattern.permute.xlu0 0
    %119 = vperm.xlu0 %118, %v101
    %v120 = vpop.permute.xlu0 %119
    %v122 = vadd.f32 %v82, %v105
    %v123 = vadd.f32 %v83, %v105
    %v124 = vadd.f32 %v84, %v105
    %v125 = vadd.f32 %v85, %v105
    %v126 = vadd.f32 %v86, %v110
    %v127 = vadd.f32 %v87, %v110
    %v128 = vadd.f32 %v88, %v110
    %v129 = vadd.f32 %v89, %v110
    %v130 = vadd.f32 %v90, %v115
    %v131 = vadd.f32 %v91, %v115
    %v132 = vadd.f32 %v92, %v115
    %v133 = vadd.f32 %v93, %v115
    %v134 = vadd.f32 %v94, %v120
    %v135 = vadd.f32 %v95, %v120
    %v136 = vadd.f32 %v96, %v120
    %v137 = vadd.f32 %v97, %v120
    %v138 = vmax.f32 %v122, 0.0
    %v139 = vmax.f32 %v123, 0.0
    %v140 = vmax.f32 %v124, 0.0
    %v141 = vmax.f32 %v125, 0.0
    %v142 = vmax.f32 %v126, 0.0
    %v143 = vmax.f32 %v127, 0.0
    %v144 = vmax.f32 %v128, 0.0
    %v145 = vmax.f32 %v129, 0.0
    %v146 = vmax.f32 %v130, 0.0
    %v147 = vmax.f32 %v131, 0.0
    %v148 = vmax.f32 %v132, 0.0
    %v149 = vmax.f32 %v133, 0.0
    %v150 = vmax.f32 %v134, 0.0
    %v151 = vmax.f32 %v135, 0.0
    %v152 = vmax.f32 %v136, 0.0
    %v153 = vmax.f32 %v137, 0.0
    %v154 = vld [vmem:[%s3] sm:$0xf]
    %v155 = vld [vmem:[%s3 + $0x4] sm:$0xf]
    %v156 = vld [vmem:[%s3 + $0x8] sm:$0xf]
    %v157 = vld [vmem:[%s3 + $0xc] sm:$0xf]
    %v158 = vld [vmem:[%s3 + $0x10] sm:$0xf]
    %v159 = vld [vmem:[%s3 + $0x14] sm:$0xf]
    %v160 = vld [vmem:[%s3 + $0x18] sm:$0xf]
    %v161 = vld [vmem:[%s3 + $0x1c] sm:$0xf]
    %v162 = vpack.c.bf16 %v142, %v138
    %v163 = vpack.c.bf16 %v143, %v139
    %v164 = vpack.c.bf16 %v144, %v140
    %v165 = vpack.c.bf16 %v145, %v141
    %v166 = vpack.c.bf16 %v150, %v146
    %v167 = vpack.c.bf16 %v151, %v147
    %v168 = vpack.c.bf16 %v152, %v148
    %v169 = vpack.c.bf16 %v153, %v149
    %v170 = vld [vmem:[%s4] sm:$0xff]
    %v171 = vld [vmem:[%s4 + $0x8] sm:$0xff]
    %v172 = vld [vmem:[%s4 + $0x10] sm:$0xff]
    %v173 = vld [vmem:[%s4 + $0x18] sm:$0xff]
    %v174 = vld [vmem:[%s4 + $0x20] sm:$0xff]
    %v175 = vld [vmem:[%s4 + $0x28] sm:$0xff]
    %v176 = vld [vmem:[%s4 + $0x30] sm:$0xff]
    %v177 = vld [vmem:[%s4 + $0x38] sm:$0xff]
    %179 = vset.pattern.permute.xlu0 0
    %180 = vperm.xlu0 %179, %v170
    %v181 = vpop.permute.xlu0 %180
    %184 = vset.pattern.permute.xlu0 0
    %185 = vperm.xlu0 %184, %v171
    %v186 = vpop.permute.xlu0 %185
    %189 = vset.pattern.permute.xlu0 0
    %190 = vperm.xlu0 %189, %v172
    %v191 = vpop.permute.xlu0 %190
    %194 = vset.pattern.permute.xlu0 0
    %195 = vperm.xlu0 %194, %v173
    %v196 = vpop.permute.xlu0 %195
    %199 = vset.pattern.permute.xlu0 0
    %200 = vperm.xlu0 %199, %v174
    %v201 = vpop.permute.xlu0 %200
    %204 = vset.pattern.permute.xlu0 0
    %205 = vperm.xlu0 %204, %v175
    %v206 = vpop.permute.xlu0 %205
    %209 = vset.pattern.permute.xlu0 0
    %210 = vperm.xlu0 %209, %v176
    %v211 = vpop.permute.xlu0 %210
    %214 = vset.pattern.permute.xlu0 0
    %215 = vperm.xlu0 %214, %v177
    %v216 = vpop.permute.xlu0 %215
    %v226 = vunpack.c.l.b16 %v154
    %v227 = vunpack.c.l.b16 %v155
    %v228 = vunpack.c.l.b16 %v156
    %v229 = vunpack.c.l.b16 %v157
    %v230 = vunpack.c.l.b16 %v158
    %v231 = vunpack.c.l.b16 %v159
    %v232 = vunpack.c.l.b16 %v160
    %v233 = vunpack.c.l.b16 %v161
    %v234 = vpack.c.b16 %v227, %v226
    %v235 = vpack.c.b16 %v229, %v228
    %v236 = vpack.c.b16 %v231, %v230
    %v237 = vpack.c.b16 %v233, %v232
    %vm238 = vcmask 261120
    %v240 = vsel %vm238, %v234, 0
    %v243 = vsel %vm238, %v235, 0
    %v246 = vsel %vm238, %v236, 0
    %v249 = vsel %vm238, %v237, 0
    %251 = vmatprep.subr.bf16.mxu0 %v163
    %252 = vmatpush1.bf16.msra.mxu0 %v162
    %253 = vmatprep.subr.bf16.mxu0 %v167
    %254 = vmatpush1.bf16.msra.mxu0 %v166
    %255 = vmatprep.subr.bf16.mxu0 0
    %256 = vmatpush1.bf16.msra.mxu0 0
    %257 = vmatprep.subr.bf16.mxu0 0
    %258 = vmatpush1.bf16.msra.mxu0 0
    %259 = vmatprep.subr.bf16.mxu0 0
    %260 = vmatpush1.bf16.msra.mxu0 0
    %261 = vmatprep.subr.bf16.mxu0 0
    %262 = vmatpush1.bf16.msra.mxu0 0
    %263 = vmatprep.subr.bf16.mxu0 0
    %264 = vmatpush1.bf16.msra.mxu0 0
    %265 = vmatprep.subr.bf16.mxu0 0
    %266 = vmatpush1.bf16.msra.mxu0 0
    %267 = vmatprep.subr.bf16.mxu0 0
    %268 = vmatpush1.bf16.msra.mxu0 0
    %269 = vmatprep.subr.bf16.mxu0 0
    %270 = vmatpush1.bf16.msra.mxu0 0
    %271 = vmatprep.subr.bf16.mxu0 0
    %272 = vmatpush1.bf16.msra.mxu0 0
    %273 = vmatprep.subr.bf16.mxu0 0
    %274 = vmatpush1.bf16.msra.mxu0 0
    %275 = vmatprep.subr.bf16.mxu0 0
    %276 = vmatpush1.bf16.msra.mxu0 0
    %277 = vmatprep.subr.bf16.mxu0 0
    %278 = vmatpush1.bf16.msra.mxu0 0
    %279 = vmatprep.subr.bf16.mxu0 0
    %280 = vmatpush1.bf16.msra.mxu0 0
    %281 = vmatprep.subr.bf16.mxu0 0
    %282 = vmatpush1.bf16.msra.mxu0 0
    %283 = vmatprep.mubr.bf16.mxu0 0
    %284 = vmatmul.mubr.bf16.gmra.mrb[0].mxu0 %v240
    %v285 = vpop.f32.mrb[0].mxu0
    %v286 = vadd.f32 %v181, %v285
    %v287 = vpop.f32.mrb[0].mxu0
    %v288 = vadd.f32 %v181, %v287
    %v289 = vpop.f32.mrb[0].mxu0
    %v290 = vadd.f32 %v186, %v289
    %v291 = vpop.f32.mrb[0].mxu0
    %v292 = vadd.f32 %v186, %v291
    %293 = vmatprep.mubr.bf16.mxu0 0
    %294 = vmatmul.mubr.bf16.gmra.mrb[0].mxu0 %v243
    %v295 = vpop.f32.mrb[0].mxu0
    %v296 = vadd.f32 %v191, %v295
    %v297 = vpop.f32.mrb[0].mxu0
    %v298 = vadd.f32 %v191, %v297
    %v299 = vpop.f32.mrb[0].mxu0
    %v300 = vadd.f32 %v196, %v299
    %v301 = vpop.f32.mrb[0].mxu0
    %v302 = vadd.f32 %v196, %v301
    %303 = vmatprep.mubr.bf16.mxu0 0
    %304 = vmatmul.mubr.bf16.gmra.mrb[0].mxu0 %v246
    %v305 = vpop.f32.mrb[0].mxu0
    %v306 = vadd.f32 %v201, %v305
    %v307 = vpop.f32.mrb[0].mxu0
    %v308 = vadd.f32 %v201, %v307
    %v309 = vpop.f32.mrb[0].mxu0
    %v310 = vadd.f32 %v206, %v309
    %v311 = vpop.f32.mrb[0].mxu0
    %v312 = vadd.f32 %v206, %v311
    %313 = vmatprep.mubr.bf16.mxu0 0
    %314 = vmatmul.mubr.bf16.gmra.mrb[0].mxu0 %v249
    %v315 = vpop.f32.mrb[0].mxu0
    %v316 = vadd.f32 %v211, %v315
    %v317 = vpop.f32.mrb[0].mxu0
    %v318 = vadd.f32 %v211, %v317
    %v319 = vpop.f32.mrb[0].mxu0
    %v320 = vadd.f32 %v216, %v319
    %v321 = vpop.f32.mrb[0].mxu0
    %v322 = vadd.f32 %v216, %v321
    %323 = vdwg.mxu0
    %324 = vmatprep.subr.bf16.mxu0 %v165
    %325 = vmatpush1.bf16.msra.mxu0 %v164
    %326 = vmatprep.subr.bf16.mxu0 %v169
    %327 = vmatpush1.bf16.msra.mxu0 %v168
    %328 = vmatprep.subr.bf16.mxu0 0
    %329 = vmatpush1.bf16.msra.mxu0 0
    %330 = vmatprep.subr.bf16.mxu0 0
    %331 = vmatpush1.bf16.msra.mxu0 0
    %332 = vmatprep.subr.bf16.mxu0 0
    %333 = vmatpush1.bf16.msra.mxu0 0
    %334 = vmatprep.subr.bf16.mxu0 0
    %335 = vmatpush1.bf16.msra.mxu0 0
    %336 = vmatprep.subr.bf16.mxu0 0
    %337 = vmatpush1.bf16.msra.mxu0 0
    %338 = vmatprep.subr.bf16.mxu0 0
    %339 = vmatpush1.bf16.msra.mxu0 0
    %340 = vmatprep.subr.bf16.mxu0 0
    %341 = vmatpush1.bf16.msra.mxu0 0
    %342 = vmatprep.subr.bf16.mxu0 0
    %343 = vmatpush1.bf16.msra.mxu0 0
    %344 = vmatprep.subr.bf16.mxu0 0
    %345 = vmatpush1.bf16.msra.mxu0 0
    %346 = vmatprep.subr.bf16.mxu0 0
    %347 = vmatpush1.bf16.msra.mxu0 0
    %348 = vmatprep.subr.bf16.mxu0 0
    %349 = vmatpush1.bf16.msra.mxu0 0
    %350 = vmatprep.subr.bf16.mxu0 0
    %351 = vmatpush1.bf16.msra.mxu0 0
    %352 = vmatprep.subr.bf16.mxu0 0
    %353 = vmatpush1.bf16.msra.mxu0 0
    %354 = vmatprep.subr.bf16.mxu0 0
    %355 = vmatpush1.bf16.msra.mxu0 0
    %356 = vmatprep.mubr.bf16.mxu0 0
    %357 = vmatmul.mubr.bf16.gmra.mrb[0].mxu0 %v240
    %v358 = vpop.f32.mrb[0].mxu0
    %v359 = vadd.f32 %v181, %v358
    %v360 = vpop.f32.mrb[0].mxu0
    %v361 = vadd.f32 %v181, %v360
    %v362 = vpop.f32.mrb[0].mxu0
    %v363 = vadd.f32 %v186, %v362
    %v364 = vpop.f32.mrb[0].mxu0
    %v365 = vadd.f32 %v186, %v364
    %366 = vmatprep.mubr.bf16.mxu0 0
    %367 = vmatmul.mubr.bf16.gmra.mrb[0].mxu0 %v243
    %v368 = vpop.f32.mrb[0].mxu0
    %v369 = vadd.f32 %v191, %v368
    %v370 = vpop.f32.mrb[0].mxu0
    %v371 = vadd.f32 %v191, %v370
    %v372 = vpop.f32.mrb[0].mxu0
    %v373 = vadd.f32 %v196, %v372
    %v374 = vpop.f32.mrb[0].mxu0
    %v375 = vadd.f32 %v196, %v374
    %376 = vmatprep.mubr.bf16.mxu0 0
    %377 = vmatmul.mubr.bf16.gmra.mrb[0].mxu0 %v246
    %v378 = vpop.f32.mrb[0].mxu0
    %v379 = vadd.f32 %v201, %v378
    %v380 = vpop.f32.mrb[0].mxu0
    %v381 = vadd.f32 %v201, %v380
    %v382 = vpop.f32.mrb[0].mxu0
    %v383 = vadd.f32 %v206, %v382
    %v384 = vpop.f32.mrb[0].mxu0
    %v385 = vadd.f32 %v206, %v384
    %386 = vmatprep.mubr.bf16.mxu0 0
    %387 = vmatmul.mubr.bf16.gmra.mrb[0].mxu0 %v249
    %v388 = vpop.f32.mrb[0].mxu0
    %v389 = vadd.f32 %v211, %v388
    %v390 = vpop.f32.mrb[0].mxu0
    %v391 = vadd.f32 %v211, %v390
    %v392 = vpop.f32.mrb[0].mxu0
    %v393 = vadd.f32 %v216, %v392
    %v394 = vpop.f32.mrb[0].mxu0
    %v395 = vadd.f32 %v216, %v394
    %396 = vdwg.mxu0
    %v397 = vmax.f32 %v286, 0.0
    %v398 = vmax.f32 %v288, 0.0
    %v399 = vmax.f32 %v359, 0.0
    %v400 = vmax.f32 %v361, 0.0
    %v401 = vmax.f32 %v290, 0.0
    %v402 = vmax.f32 %v292, 0.0
    %v403 = vmax.f32 %v363, 0.0
    %v404 = vmax.f32 %v365, 0.0
    %v405 = vmax.f32 %v296, 0.0
    %v406 = vmax.f32 %v298, 0.0
    %v407 = vmax.f32 %v369, 0.0
    %v408 = vmax.f32 %v371, 0.0
    %v409 = vmax.f32 %v300, 0.0
    %v410 = vmax.f32 %v302, 0.0
    %v411 = vmax.f32 %v373, 0.0
    %v412 = vmax.f32 %v375, 0.0
    %v413 = vmax.f32 %v306, 0.0
    %v414 = vmax.f32 %v308, 0.0
    %v415 = vmax.f32 %v379, 0.0
    %v416 = vmax.f32 %v381, 0.0
    %v417 = vmax.f32 %v310, 0.0
    %v418 = vmax.f32 %v312, 0.0
    %v419 = vmax.f32 %v383, 0.0
    %v420 = vmax.f32 %v385, 0.0
    %v421 = vmax.f32 %v316, 0.0
    %v422 = vmax.f32 %v318, 0.0
    %v423 = vmax.f32 %v389, 0.0
    %v424 = vmax.f32 %v391, 0.0
    %v425 = vmax.f32 %v320, 0.0
    %v426 = vmax.f32 %v322, 0.0
    %v427 = vmax.f32 %v393, 0.0
    %v428 = vmax.f32 %v395, 0.0
    %v429 = vld [vmem:[%s5] sm:$0xf]
    %v430 = vld [vmem:[%s5 + $0x4] sm:$0xf]
    %v431 = vld [vmem:[%s5 + $0x8] sm:$0xf]
    %v432 = vld [vmem:[%s5 + $0xc] sm:$0xf]
    %v433 = vld [vmem:[%s5 + $0x10] sm:$0xf]
    %v434 = vld [vmem:[%s5 + $0x14] sm:$0xf]
    %v435 = vld [vmem:[%s5 + $0x18] sm:$0xf]
    %v436 = vld [vmem:[%s5 + $0x1c] sm:$0xf]
    %v437 = vld [vmem:[%s5 + $0x20] sm:$0xf]
    %v438 = vld [vmem:[%s5 + $0x24] sm:$0xf]
    %v439 = vld [vmem:[%s5 + $0x28] sm:$0xf]
    %v440 = vld [vmem:[%s5 + $0x2c] sm:$0xf]
    %v441 = vld [vmem:[%s5 + $0x30] sm:$0xf]
    %v442 = vld [vmem:[%s5 + $0x34] sm:$0xf]
    %v443 = vld [vmem:[%s5 + $0x38] sm:$0xf]
    %v444 = vld [vmem:[%s5 + $0x3c] sm:$0xf]
    %v445 = vpack.c.bf16 %v401, %v397
    %v446 = vpack.c.bf16 %v402, %v398
    %v447 = vpack.c.bf16 %v403, %v399
    %v448 = vpack.c.bf16 %v404, %v400
    %v449 = vpack.c.bf16 %v409, %v405
    %v450 = vpack.c.bf16 %v410, %v406
    %v451 = vpack.c.bf16 %v411, %v407
    %v452 = vpack.c.bf16 %v412, %v408
    %v453 = vpack.c.bf16 %v417, %v413
    %v454 = vpack.c.bf16 %v418, %v414
    %v455 = vpack.c.bf16 %v419, %v415
    %v456 = vpack.c.bf16 %v420, %v416
    %v457 = vpack.c.bf16 %v425, %v421
    %v458 = vpack.c.bf16 %v426, %v422
    %v459 = vpack.c.bf16 %v427, %v423
    %v460 = vpack.c.bf16 %v428, %v424
    %v461 = vld [vmem:[%s6] sm:$0xff]
    %v462 = vld [vmem:[%s6 + $0x8] sm:$0xff]
    %v463 = vld [vmem:[%s6 + $0x10] sm:$0xff]
    %v464 = vld [vmem:[%s6 + $0x18] sm:$0xff]
    %v465 = vld [vmem:[%s6 + $0x20] sm:$0xff]
    %v466 = vld [vmem:[%s6 + $0x28] sm:$0xff]
    %v467 = vld [vmem:[%s6 + $0x30] sm:$0xff]
    %v468 = vld [vmem:[%s6 + $0x38] sm:$0xff]
    %v469 = vld [vmem:[%s6 + $0x40] sm:$0xff]
    %v470 = vld [vmem:[%s6 + $0x48] sm:$0xff]
    %v471 = vld [vmem:[%s6 + $0x50] sm:$0xff]
    %v472 = vld [vmem:[%s6 + $0x58] sm:$0xff]
    %v473 = vld [vmem:[%s6 + $0x60] sm:$0xff]
    %v474 = vld [vmem:[%s6 + $0x68] sm:$0xff]
    %v475 = vld [vmem:[%s6 + $0x70] sm:$0xff]
    %v476 = vld [vmem:[%s6 + $0x78] sm:$0xff]
    %478 = vset.pattern.permute.xlu0 0
    %479 = vperm.xlu0 %478, %v461
    %v480 = vpop.permute.xlu0 %479
    %483 = vset.pattern.permute.xlu0 0
    %484 = vperm.xlu0 %483, %v462
    %v485 = vpop.permute.xlu0 %484
    %488 = vset.pattern.permute.xlu0 0
    %489 = vperm.xlu0 %488, %v463
    %v490 = vpop.permute.xlu0 %489
    %493 = vset.pattern.permute.xlu0 0
    %494 = vperm.xlu0 %493, %v464
    %v495 = vpop.permute.xlu0 %494
    %498 = vset.pattern.permute.xlu0 0
    %499 = vperm.xlu0 %498, %v465
    %v500 = vpop.permute.xlu0 %499
    %503 = vset.pattern.permute.xlu0 0
    %504 = vperm.xlu0 %503, %v466
    %v505 = vpop.permute.xlu0 %504
    %508 = vset.pattern.permute.xlu0 0
    %509 = vperm.xlu0 %508, %v467
    %v510 = vpop.permute.xlu0 %509
    %513 = vset.pattern.permute.xlu0 0
    %514 = vperm.xlu0 %513, %v468
    %v515 = vpop.permute.xlu0 %514
    %518 = vset.pattern.permute.xlu0 0
    %519 = vperm.xlu0 %518, %v469
    %v520 = vpop.permute.xlu0 %519
    %523 = vset.pattern.permute.xlu0 0
    %524 = vperm.xlu0 %523, %v470
    %v525 = vpop.permute.xlu0 %524
    %528 = vset.pattern.permute.xlu0 0
    %529 = vperm.xlu0 %528, %v471
    %v530 = vpop.permute.xlu0 %529
    %533 = vset.pattern.permute.xlu0 0
    %534 = vperm.xlu0 %533, %v472
    %v535 = vpop.permute.xlu0 %534
    %538 = vset.pattern.permute.xlu0 0
    %539 = vperm.xlu0 %538, %v473
    %v540 = vpop.permute.xlu0 %539
    %543 = vset.pattern.permute.xlu0 0
    %544 = vperm.xlu0 %543, %v474
    %v545 = vpop.permute.xlu0 %544
    %548 = vset.pattern.permute.xlu0 0
    %549 = vperm.xlu0 %548, %v475
    %v550 = vpop.permute.xlu0 %549
    %553 = vset.pattern.permute.xlu0 0
    %554 = vperm.xlu0 %553, %v476
    %v555 = vpop.permute.xlu0 %554
    %v573 = vunpack.c.l.b16 %v429
    %v574 = vunpack.c.l.b16 %v430
    %v575 = vunpack.c.l.b16 %v431
    %v576 = vunpack.c.l.b16 %v432
    %v577 = vunpack.c.l.b16 %v433
    %v578 = vunpack.c.l.b16 %v434
    %v579 = vunpack.c.l.b16 %v435
    %v580 = vunpack.c.l.b16 %v436
    %v581 = vunpack.c.l.b16 %v437
    %v582 = vunpack.c.l.b16 %v438
    %v583 = vunpack.c.l.b16 %v439
    %v584 = vunpack.c.l.b16 %v440
    %v585 = vunpack.c.l.b16 %v441
    %v586 = vunpack.c.l.b16 %v442
    %v587 = vunpack.c.l.b16 %v443
    %v588 = vunpack.c.l.b16 %v444
    %v589 = vpack.c.b16 %v574, %v573
    %v590 = vpack.c.b16 %v576, %v575
    %v591 = vpack.c.b16 %v578, %v577
    %v592 = vpack.c.b16 %v580, %v579
    %v593 = vpack.c.b16 %v582, %v581
    %v594 = vpack.c.b16 %v584, %v583
    %v595 = vpack.c.b16 %v586, %v585
    %v596 = vpack.c.b16 %v588, %v587
    %vm597 = vcmask 523264
    %v599 = vsel %vm597, %v589, 0
    %v602 = vsel %vm597, %v590, 0
    %v605 = vsel %vm597, %v591, 0
    %v608 = vsel %vm597, %v592, 0
    %v611 = vsel %vm597, %v593, 0
    %v614 = vsel %vm597, %v594, 0
    %v617 = vsel %vm597, %v595, 0
    %v620 = vsel %vm597, %v596, 0
    %622 = vmatprep.subr.bf16.mxu0 %v446
    %623 = vmatpush1.bf16.msra.mxu0 %v445
    %624 = vmatprep.subr.bf16.mxu0 %v450
    %625 = vmatpush1.bf16.msra.mxu0 %v449
    %626 = vmatprep.subr.bf16.mxu0 %v454
    %627 = vmatpush1.bf16.msra.mxu0 %v453
    %628 = vmatprep.subr.bf16.mxu0 %v458
    %629 = vmatpush1.bf16.msra.mxu0 %v457
    %630 = vmatprep.subr.bf16.mxu0 0
    %631 = vmatpush1.bf16.msra.mxu0 0
    %632 = vmatprep.subr.bf16.mxu0 0
    %633 = vmatpush1.bf16.msra.mxu0 0
    %634 = vmatprep.subr.bf16.mxu0 0
    %635 = vmatpush1.bf16.msra.mxu0 0
    %636 = vmatprep.subr.bf16.mxu0 0
    %637 = vmatpush1.bf16.msra.mxu0 0
    %638 = vmatprep.subr.bf16.mxu0 0
    %639 = vmatpush1.bf16.msra.mxu0 0
    %640 = vmatprep.subr.bf16.mxu0 0
    %641 = vmatpush1.bf16.msra.mxu0 0
    %642 = vmatprep.subr.bf16.mxu0 0
    %643 = vmatpush1.bf16.msra.mxu0 0
    %644 = vmatprep.subr.bf16.mxu0 0
    %645 = vmatpush1.bf16.msra.mxu0 0
    %646 = vmatprep.subr.bf16.mxu0 0
    %647 = vmatpush1.bf16.msra.mxu0 0
    %648 = vmatprep.subr.bf16.mxu0 0
    %649 = vmatpush1.bf16.msra.mxu0 0
    %650 = vmatprep.subr.bf16.mxu0 0
    %651 = vmatpush1.bf16.msra.mxu0 0
    %652 = vmatprep.subr.bf16.mxu0 0
    %653 = vmatpush1.bf16.msra.mxu0 0
    %654 = vmatprep.mubr.bf16.mxu0 0
    %655 = vmatmul.mubr.bf16.gmra.mrb[0].mxu0 %v599
    %v656 = vpop.f32.mrb[0].mxu0
    %v657 = vadd.f32 %v480, %v656
    %v658 = vpop.f32.mrb[0].mxu0
    %v659 = vadd.f32 %v480, %v658
    %v660 = vpop.f32.mrb[0].mxu0
    %v661 = vadd.f32 %v485, %v660
    %v662 = vpop.f32.mrb[0].mxu0
    %v663 = vadd.f32 %v485, %v662
    %664 = vmatprep.mubr.bf16.mxu0 0
    %665 = vmatmul.mubr.bf16.gmra.mrb[0].mxu0 %v602
    %v666 = vpop.f32.mrb[0].mxu0
    %v667 = vadd.f32 %v490, %v666
    %v668 = vpop.f32.mrb[0].mxu0
    %v669 = vadd.f32 %v490, %v668
    %v670 = vpop.f32.mrb[0].mxu0
    %v671 = vadd.f32 %v495, %v670
    %v672 = vpop.f32.mrb[0].mxu0
    %v673 = vadd.f32 %v495, %v672
    %674 = vmatprep.mubr.bf16.mxu0 0
    %675 = vmatmul.mubr.bf16.gmra.mrb[0].mxu0 %v605
    %v676 = vpop.f32.mrb[0].mxu0
    %v677 = vadd.f32 %v500, %v676
    %v678 = vpop.f32.mrb[0].mxu0
    %v679 = vadd.f32 %v500, %v678
    %v680 = vpop.f32.mrb[0].mxu0
    %v681 = vadd.f32 %v505, %v680
    %v682 = vpop.f32.mrb[0].mxu0
    %v683 = vadd.f32 %v505, %v682
    %684 = vmatprep.mubr.bf16.mxu0 0
    %685 = vmatmul.mubr.bf16.gmra.mrb[0].mxu0 %v608
    %v686 = vpop.f32.mrb[0].mxu0
    %v687 = vadd.f32 %v510, %v686
    %v688 = vpop.f32.mrb[0].mxu0
    %v689 = vadd.f32 %v510, %v688
    %v690 = vpop.f32.mrb[0].mxu0
    %v691 = vadd.f32 %v515, %v690
    %v692 = vpop.f32.mrb[0].mxu0
    %v693 = vadd.f32 %v515, %v692
    %694 = vmatprep.mubr.bf16.mxu0 0
    %695 = vmatmul.mubr.bf16.gmra.mrb[0].mxu0 %v611
    %v696 = vpop.f32.mrb[0].mxu0
    %v697 = vadd.f32 %v520, %v696
    %v698 = vpop.f32.mrb[0].mxu0
    %v699 = vadd.f32 %v520, %v698
    %v700 = vpop.f32.mrb[0].mxu0
    %v701 = vadd.f32 %v525, %v700
    %v702 = vpop.f32.mrb[0].mxu0
    %v703 = vadd.f32 %v525, %v702
    %704 = vmatprep.mubr.bf16.mxu0 0
    %705 = vmatmul.mubr.bf16.gmra.mrb[0].mxu0 %v614
    %v706 = vpop.f32.mrb[0].mxu0
    %v707 = vadd.f32 %v530, %v706
    %v708 = vpop.f32.mrb[0].mxu0
    %v709 = vadd.f32 %v530, %v708
    %v710 = vpop.f32.mrb[0].mxu0
    %v711 = vadd.f32 %v535, %v710
    %v712 = vpop.f32.mrb[0].mxu0
    %v713 = vadd.f32 %v535, %v712
    %714 = vmatprep.mubr.bf16.mxu0 0
    %715 = vmatmul.mubr.bf16.gmra.mrb[0].mxu0 %v617
    %v716 = vpop.f32.mrb[0].mxu0
    %v717 = vadd.f32 %v540, %v716
    %v718 = vpop.f32.mrb[0].mxu0
    %v719 = vadd.f32 %v540, %v718
    %v720 = vpop.f32.mrb[0].mxu0
    %v721 = vadd.f32 %v545, %v720
    %v722 = vpop.f32.mrb[0].mxu0
    %v723 = vadd.f32 %v545, %v722
    %724 = vmatprep.mubr.bf16.mxu0 0
    %725 = vmatmul.mubr.bf16.gmra.mrb[0].mxu0 %v620
    %v726 = vpop.f32.mrb[0].mxu0
    %v727 = vadd.f32 %v550, %v726
    %v728 = vpop.f32.mrb[0].mxu0
    %v729 = vadd.f32 %v550, %v728
    %v730 = vpop.f32.mrb[0].mxu0
    %v731 = vadd.f32 %v555, %v730
    %v732 = vpop.f32.mrb[0].mxu0
    %v733 = vadd.f32 %v555, %v732
    %734 = vdwg.mxu0
    %735 = vmatprep.subr.bf16.mxu0 %v448
    %736 = vmatpush1.bf16.msra.mxu0 %v447
    %737 = vmatprep.subr.bf16.mxu0 %v452
    %738 = vmatpush1.bf16.msra.mxu0 %v451
    %739 = vmatprep.subr.bf16.mxu0 %v456
    %740 = vmatpush1.bf16.msra.mxu0 %v455
    %741 = vmatprep.subr.bf16.mxu0 %v460
    %742 = vmatpush1.bf16.msra.mxu0 %v459
    %743 = vmatprep.subr.bf16.mxu0 0
    %744 = vmatpush1.bf16.msra.mxu0 0
    %745 = vmatprep.subr.bf16.mxu0 0
    %746 = vmatpush1.bf16.msra.mxu0 0
    %747 = vmatprep.subr.bf16.mxu0 0
    %748 = vmatpush1.bf16.msra.mxu0 0
    %749 = vmatprep.subr.bf16.mxu0 0
    %750 = vmatpush1.bf16.msra.mxu0 0
    %751 = vmatprep.subr.bf16.mxu0 0
    %752 = vmatpush1.bf16.msra.mxu0 0
    %753 = vmatprep.subr.bf16.mxu0 0
    %754 = vmatpush1.bf16.msra.mxu0 0
    %755 = vmatprep.subr.bf16.mxu0 0
    %756 = vmatpush1.bf16.msra.mxu0 0
    %757 = vmatprep.subr.bf16.mxu0 0
    %758 = vmatpush1.bf16.msra.mxu0 0
    %759 = vmatprep.subr.bf16.mxu0 0
    %760 = vmatpush1.bf16.msra.mxu0 0
    %761 = vmatprep.subr.bf16.mxu0 0
    %762 = vmatpush1.bf16.msra.mxu0 0
    %763 = vmatprep.subr.bf16.mxu0 0
    %764 = vmatpush1.bf16.msra.mxu0 0
    %765 = vmatprep.subr.bf16.mxu0 0
    %766 = vmatpush1.bf16.msra.mxu0 0
    %767 = vmatprep.mubr.bf16.mxu0 0
    %768 = vmatmul.mubr.bf16.gmra.mrb[0].mxu0 %v599
    %v769 = vpop.f32.mrb[0].mxu0
    %v770 = vadd.f32 %v480, %v769
    %v771 = vpop.f32.mrb[0].mxu0
    %v772 = vadd.f32 %v480, %v771
    %v773 = vpop.f32.mrb[0].mxu0
    %v774 = vadd.f32 %v485, %v773
    %v775 = vpop.f32.mrb[0].mxu0
    %v776 = vadd.f32 %v485, %v775
    %777 = vmatprep.mubr.bf16.mxu0 0
    %778 = vmatmul.mubr.bf16.gmra.mrb[0].mxu0 %v602
    %v779 = vpop.f32.mrb[0].mxu0
    %v780 = vadd.f32 %v490, %v779
    %v781 = vpop.f32.mrb[0].mxu0
    %v782 = vadd.f32 %v490, %v781
    %v783 = vpop.f32.mrb[0].mxu0
    %v784 = vadd.f32 %v495, %v783
    %v785 = vpop.f32.mrb[0].mxu0
    %v786 = vadd.f32 %v495, %v785
    %787 = vmatprep.mubr.bf16.mxu0 0
    %788 = vmatmul.mubr.bf16.gmra.mrb[0].mxu0 %v605
    %v789 = vpop.f32.mrb[0].mxu0
    %v790 = vadd.f32 %v500, %v789
    %v791 = vpop.f32.mrb[0].mxu0
    %v792 = vadd.f32 %v500, %v791
    %v793 = vpop.f32.mrb[0].mxu0
    %v794 = vadd.f32 %v505, %v793
    %v795 = vpop.f32.mrb[0].mxu0
    %v796 = vadd.f32 %v505, %v795
    %797 = vmatprep.mubr.bf16.mxu0 0
    %798 = vmatmul.mubr.bf16.gmra.mrb[0].mxu0 %v608
    %v799 = vpop.f32.mrb[0].mxu0
    %v800 = vadd.f32 %v510, %v799
    %v801 = vpop.f32.mrb[0].mxu0
    %v802 = vadd.f32 %v510, %v801
    %v803 = vpop.f32.mrb[0].mxu0
    %v804 = vadd.f32 %v515, %v803
    %v805 = vpop.f32.mrb[0].mxu0
    %v806 = vadd.f32 %v515, %v805
    %807 = vmatprep.mubr.bf16.mxu0 0
    %808 = vmatmul.mubr.bf16.gmra.mrb[0].mxu0 %v611
    %v809 = vpop.f32.mrb[0].mxu0
    %v810 = vadd.f32 %v520, %v809
    %v811 = vpop.f32.mrb[0].mxu0
    %v812 = vadd.f32 %v520, %v811
    %v813 = vpop.f32.mrb[0].mxu0
    %v814 = vadd.f32 %v525, %v813
    %v815 = vpop.f32.mrb[0].mxu0
    %v816 = vadd.f32 %v525, %v815
    %817 = vmatprep.mubr.bf16.mxu0 0
    %818 = vmatmul.mubr.bf16.gmra.mrb[0].mxu0 %v614
    %v819 = vpop.f32.mrb[0].mxu0
    %v820 = vadd.f32 %v530, %v819
    %v821 = vpop.f32.mrb[0].mxu0
    %v822 = vadd.f32 %v530, %v821
    %v823 = vpop.f32.mrb[0].mxu0
    %v824 = vadd.f32 %v535, %v823
    %v825 = vpop.f32.mrb[0].mxu0
    %v826 = vadd.f32 %v535, %v825
    %827 = vmatprep.mubr.bf16.mxu0 0
    %828 = vmatmul.mubr.bf16.gmra.mrb[0].mxu0 %v617
    %v829 = vpop.f32.mrb[0].mxu0
    %v830 = vadd.f32 %v540, %v829
    %v831 = vpop.f32.mrb[0].mxu0
    %v832 = vadd.f32 %v540, %v831
    %v833 = vpop.f32.mrb[0].mxu0
    %v834 = vadd.f32 %v545, %v833
    %v835 = vpop.f32.mrb[0].mxu0
    %v836 = vadd.f32 %v545, %v835
    %837 = vmatprep.mubr.bf16.mxu0 0
    %838 = vmatmul.mubr.bf16.gmra.mrb[0].mxu0 %v620
    %v839 = vpop.f32.mrb[0].mxu0
    %v840 = vadd.f32 %v550, %v839
    %v841 = vpop.f32.mrb[0].mxu0
    %v842 = vadd.f32 %v550, %v841
    %v843 = vpop.f32.mrb[0].mxu0
    %v844 = vadd.f32 %v555, %v843
    %v845 = vpop.f32.mrb[0].mxu0
    %v846 = vadd.f32 %v555, %v845
    %847 = vdwg.mxu0
    %v848 = vmax.f32 %v657, 0.0
    %v849 = vmax.f32 %v659, 0.0
    %v850 = vmax.f32 %v770, 0.0
    %v851 = vmax.f32 %v772, 0.0
    %v852 = vmax.f32 %v661, 0.0
    %v853 = vmax.f32 %v663, 0.0
    %v854 = vmax.f32 %v774, 0.0
    %v855 = vmax.f32 %v776, 0.0
    %v856 = vmax.f32 %v667, 0.0
    %v857 = vmax.f32 %v669, 0.0
    %v858 = vmax.f32 %v780, 0.0
    %v859 = vmax.f32 %v782, 0.0
    %v860 = vmax.f32 %v671, 0.0
    %v861 = vmax.f32 %v673, 0.0
    %v862 = vmax.f32 %v784, 0.0
    %v863 = vmax.f32 %v786, 0.0
    %v864 = vmax.f32 %v677, 0.0
    %v865 = vmax.f32 %v679, 0.0
    %v866 = vmax.f32 %v790, 0.0
    %v867 = vmax.f32 %v792, 0.0
    %v868 = vmax.f32 %v681, 0.0
    %v869 = vmax.f32 %v683, 0.0
    %v870 = vmax.f32 %v794, 0.0
    %v871 = vmax.f32 %v796, 0.0
    %v872 = vmax.f32 %v687, 0.0
    %v873 = vmax.f32 %v689, 0.0
    %v874 = vmax.f32 %v800, 0.0
    %v875 = vmax.f32 %v802, 0.0
    %v876 = vmax.f32 %v691, 0.0
    %v877 = vmax.f32 %v693, 0.0
    %v878 = vmax.f32 %v804, 0.0
    %v879 = vmax.f32 %v806, 0.0
    %v880 = vmax.f32 %v697, 0.0
    %v881 = vmax.f32 %v699, 0.0
    %v882 = vmax.f32 %v810, 0.0
    %v883 = vmax.f32 %v812, 0.0
    %v884 = vmax.f32 %v701, 0.0
    %v885 = vmax.f32 %v703, 0.0
    %v886 = vmax.f32 %v814, 0.0
    %v887 = vmax.f32 %v816, 0.0
    %v888 = vmax.f32 %v707, 0.0
    %v889 = vmax.f32 %v709, 0.0
    %v890 = vmax.f32 %v820, 0.0
    %v891 = vmax.f32 %v822, 0.0
    %v892 = vmax.f32 %v711, 0.0
    %v893 = vmax.f32 %v713, 0.0
    %v894 = vmax.f32 %v824, 0.0
    %v895 = vmax.f32 %v826, 0.0
    %v896 = vmax.f32 %v717, 0.0
    %v897 = vmax.f32 %v719, 0.0
    %v898 = vmax.f32 %v830, 0.0
    %v899 = vmax.f32 %v832, 0.0
    %v900 = vmax.f32 %v721, 0.0
    %v901 = vmax.f32 %v723, 0.0
    %v902 = vmax.f32 %v834, 0.0
    %v903 = vmax.f32 %v836, 0.0
    %v904 = vmax.f32 %v727, 0.0
    %v905 = vmax.f32 %v729, 0.0
    %v906 = vmax.f32 %v840, 0.0
    %v907 = vmax.f32 %v842, 0.0
    %v908 = vmax.f32 %v731, 0.0
    %v909 = vmax.f32 %v733, 0.0
    %v910 = vmax.f32 %v844, 0.0
    %v911 = vmax.f32 %v846, 0.0
    %v912 = vld [vmem:[%s7] sm:$0xff]
    %v913 = vld [vmem:[%s7 + $0x8] sm:$0xff]
    %v914 = vld [vmem:[%s7 + $0x10] sm:$0xff]
    %v915 = vld [vmem:[%s7 + $0x18] sm:$0xff]
    %v916 = vld [vmem:[%s7 + $0x20] sm:$0xff]
    %v917 = vld [vmem:[%s7 + $0x28] sm:$0xff]
    %v918 = vld [vmem:[%s7 + $0x30] sm:$0xff]
    %v919 = vld [vmem:[%s7 + $0x38] sm:$0xff]
    %v920 = vld [vmem:[%s7 + $0x40] sm:$0xff]
    %v921 = vld [vmem:[%s7 + $0x48] sm:$0xff]
    %v922 = vld [vmem:[%s7 + $0x50] sm:$0xff]
    %v923 = vld [vmem:[%s7 + $0x58] sm:$0xff]
    %v924 = vld [vmem:[%s7 + $0x60] sm:$0xff]
    %v925 = vld [vmem:[%s7 + $0x68] sm:$0xff]
    %v926 = vld [vmem:[%s7 + $0x70] sm:$0xff]
    %v927 = vld [vmem:[%s7 + $0x78] sm:$0xff]
    %929 = vset.pattern.permute.xlu0 0
    %930 = vperm.xlu0 %929, %v912
    %v931 = vpop.permute.xlu0 %930
    %934 = vset.pattern.permute.xlu0 0
    %935 = vperm.xlu0 %934, %v913
    %v936 = vpop.permute.xlu0 %935
    %939 = vset.pattern.permute.xlu0 0
    %940 = vperm.xlu0 %939, %v914
    %v941 = vpop.permute.xlu0 %940
    %944 = vset.pattern.permute.xlu0 0
    %945 = vperm.xlu0 %944, %v915
    %v946 = vpop.permute.xlu0 %945
    %949 = vset.pattern.permute.xlu0 0
    %950 = vperm.xlu0 %949, %v916
    %v951 = vpop.permute.xlu0 %950
    %954 = vset.pattern.permute.xlu0 0
    %955 = vperm.xlu0 %954, %v917
    %v956 = vpop.permute.xlu0 %955
    %959 = vset.pattern.permute.xlu0 0
    %960 = vperm.xlu0 %959, %v918
    %v961 = vpop.permute.xlu0 %960
    %964 = vset.pattern.permute.xlu0 0
    %965 = vperm.xlu0 %964, %v919
    %v966 = vpop.permute.xlu0 %965
    %969 = vset.pattern.permute.xlu0 0
    %970 = vperm.xlu0 %969, %v920
    %v971 = vpop.permute.xlu0 %970
    %974 = vset.pattern.permute.xlu0 0
    %975 = vperm.xlu0 %974, %v921
    %v976 = vpop.permute.xlu0 %975
    %979 = vset.pattern.permute.xlu0 0
    %980 = vperm.xlu0 %979, %v922
    %v981 = vpop.permute.xlu0 %980
    %984 = vset.pattern.permute.xlu0 0
    %985 = vperm.xlu0 %984, %v923
    %v986 = vpop.permute.xlu0 %985
    %989 = vset.pattern.permute.xlu0 0
    %990 = vperm.xlu0 %989, %v924
    %v991 = vpop.permute.xlu0 %990
    %994 = vset.pattern.permute.xlu0 0
    %995 = vperm.xlu0 %994, %v925
    %v996 = vpop.permute.xlu0 %995
    %999 = vset.pattern.permute.xlu0 0
    %1000 = vperm.xlu0 %999, %v926
    %v1001 = vpop.permute.xlu0 %1000
    %1004 = vset.pattern.permute.xlu0 0
    %1005 = vperm.xlu0 %1004, %v927
    %v1006 = vpop.permute.xlu0 %1005
    %v1008 = vmul.f32 %v931, %v848
    %v1009 = vmul.f32 %v931, %v849
    %v1010 = vmul.f32 %v931, %v850
    %v1011 = vmul.f32 %v931, %v851
    %v1012 = vmul.f32 %v936, %v852
    %v1013 = vmul.f32 %v936, %v853
    %v1014 = vmul.f32 %v936, %v854
    %v1015 = vmul.f32 %v936, %v855
    %v1016 = vmul.f32 %v941, %v856
    %v1017 = vmul.f32 %v941, %v857
    %v1018 = vmul.f32 %v941, %v858
    %v1019 = vmul.f32 %v941, %v859
    %v1020 = vmul.f32 %v946, %v860
    %v1021 = vmul.f32 %v946, %v861
    %v1022 = vmul.f32 %v946, %v862
    %v1023 = vmul.f32 %v946, %v863
    %v1024 = vmul.f32 %v951, %v864
    %v1025 = vmul.f32 %v951, %v865
    %v1026 = vmul.f32 %v951, %v866
    %v1027 = vmul.f32 %v951, %v867
    %v1028 = vmul.f32 %v956, %v868
    %v1029 = vmul.f32 %v956, %v869
    %v1030 = vmul.f32 %v956, %v870
    %v1031 = vmul.f32 %v956, %v871
    %v1032 = vmul.f32 %v961, %v872
    %v1033 = vmul.f32 %v961, %v873
    %v1034 = vmul.f32 %v961, %v874
    %v1035 = vmul.f32 %v961, %v875
    %v1036 = vmul.f32 %v966, %v876
    %v1037 = vmul.f32 %v966, %v877
    %v1038 = vmul.f32 %v966, %v878
    %v1039 = vmul.f32 %v966, %v879
    %v1040 = vmul.f32 %v971, %v880
    %v1041 = vmul.f32 %v971, %v881
    %v1042 = vmul.f32 %v971, %v882
    %v1043 = vmul.f32 %v971, %v883
    %v1044 = vmul.f32 %v976, %v884
    %v1045 = vmul.f32 %v976, %v885
    %v1046 = vmul.f32 %v976, %v886
    %v1047 = vmul.f32 %v976, %v887
    %v1048 = vmul.f32 %v981, %v888
    %v1049 = vmul.f32 %v981, %v889
    %v1050 = vmul.f32 %v981, %v890
    %v1051 = vmul.f32 %v981, %v891
    %v1052 = vmul.f32 %v986, %v892
    %v1053 = vmul.f32 %v986, %v893
    %v1054 = vmul.f32 %v986, %v894
    %v1055 = vmul.f32 %v986, %v895
    %v1056 = vmul.f32 %v991, %v896
    %v1057 = vmul.f32 %v991, %v897
    %v1058 = vmul.f32 %v991, %v898
    %v1059 = vmul.f32 %v991, %v899
    %v1060 = vmul.f32 %v996, %v900
    %v1061 = vmul.f32 %v996, %v901
    %v1062 = vmul.f32 %v996, %v902
    %v1063 = vmul.f32 %v996, %v903
    %v1064 = vmul.f32 %v1001, %v904
    %v1065 = vmul.f32 %v1001, %v905
    %v1066 = vmul.f32 %v1001, %v906
    %v1067 = vmul.f32 %v1001, %v907
    %v1068 = vmul.f32 %v1006, %v908
    %v1069 = vmul.f32 %v1006, %v909
    %v1070 = vmul.f32 %v1006, %v910
    %v1071 = vmul.f32 %v1006, %v911
    %v1072 = vadd.f32 %v1008, %v1012
    %v1073 = vadd.f32 %v1072, %v1016
    %v1074 = vadd.f32 %v1073, %v1020
    %v1075 = vadd.f32 %v1074, %v1024
    %v1076 = vadd.f32 %v1075, %v1028
    %v1077 = vadd.f32 %v1076, %v1032
    %v1078 = vadd.f32 %v1077, %v1036
    %v1079 = vadd.f32 %v1078, %v1040
    %v1080 = vadd.f32 %v1079, %v1044
    %v1081 = vadd.f32 %v1080, %v1048
    %v1082 = vadd.f32 %v1081, %v1052
    %v1083 = vadd.f32 %v1082, %v1056
    %v1084 = vadd.f32 %v1083, %v1060
    %v1085 = vadd.f32 %v1084, %v1064
    %v1086 = vadd.f32 %v1085, %v1068
    %v1087 = vrot.slane %v1086, 4
    %v1088 = vadd.f32 %v1086, %v1087
    %v1089 = vrot.slane %v1088, 2
    %v1090 = vadd.f32 %v1088, %v1089
    %v1091 = vrot.slane %v1090, 1
    %v1092 = vadd.f32 %v1090, %v1091
    %v1093 = vadd.f32 %v1009, %v1013
    %v1094 = vadd.f32 %v1093, %v1017
    %v1095 = vadd.f32 %v1094, %v1021
    %v1096 = vadd.f32 %v1095, %v1025
    %v1097 = vadd.f32 %v1096, %v1029
    %v1098 = vadd.f32 %v1097, %v1033
    %v1099 = vadd.f32 %v1098, %v1037
    %v1100 = vadd.f32 %v1099, %v1041
    %v1101 = vadd.f32 %v1100, %v1045
    %v1102 = vadd.f32 %v1101, %v1049
    %v1103 = vadd.f32 %v1102, %v1053
    %v1104 = vadd.f32 %v1103, %v1057
    %v1105 = vadd.f32 %v1104, %v1061
    %v1106 = vadd.f32 %v1105, %v1065
    %v1107 = vadd.f32 %v1106, %v1069
    %v1108 = vrot.slane %v1107, 4
    %v1109 = vadd.f32 %v1107, %v1108
    %v1110 = vrot.slane %v1109, 2
    %v1111 = vadd.f32 %v1109, %v1110
    %v1112 = vrot.slane %v1111, 1
    %v1113 = vadd.f32 %v1111, %v1112
    %v1114 = vadd.f32 %v1010, %v1014
    %v1115 = vadd.f32 %v1114, %v1018
    %v1116 = vadd.f32 %v1115, %v1022
    %v1117 = vadd.f32 %v1116, %v1026
    %v1118 = vadd.f32 %v1117, %v1030
    %v1119 = vadd.f32 %v1118, %v1034
    %v1120 = vadd.f32 %v1119, %v1038
    %v1121 = vadd.f32 %v1120, %v1042
    %v1122 = vadd.f32 %v1121, %v1046
    %v1123 = vadd.f32 %v1122, %v1050
    %v1124 = vadd.f32 %v1123, %v1054
    %v1125 = vadd.f32 %v1124, %v1058
    %v1126 = vadd.f32 %v1125, %v1062
    %v1127 = vadd.f32 %v1126, %v1066
    %v1128 = vadd.f32 %v1127, %v1070
    %v1129 = vrot.slane %v1128, 4
    %v1130 = vadd.f32 %v1128, %v1129
    %v1131 = vrot.slane %v1130, 2
    %v1132 = vadd.f32 %v1130, %v1131
    %v1133 = vrot.slane %v1132, 1
    %v1134 = vadd.f32 %v1132, %v1133
    %v1135 = vadd.f32 %v1011, %v1015
    %v1136 = vadd.f32 %v1135, %v1019
    %v1137 = vadd.f32 %v1136, %v1023
    %v1138 = vadd.f32 %v1137, %v1027
    %v1139 = vadd.f32 %v1138, %v1031
    %v1140 = vadd.f32 %v1139, %v1035
    %v1141 = vadd.f32 %v1140, %v1039
    %v1142 = vadd.f32 %v1141, %v1043
    %v1143 = vadd.f32 %v1142, %v1047
    %v1144 = vadd.f32 %v1143, %v1051
    %v1145 = vadd.f32 %v1144, %v1055
    %v1146 = vadd.f32 %v1145, %v1059
    %v1147 = vadd.f32 %v1146, %v1063
    %v1148 = vadd.f32 %v1147, %v1067
    %v1149 = vadd.f32 %v1148, %v1071
    %v1150 = vrot.slane %v1149, 4
    %v1151 = vadd.f32 %v1149, %v1150
    %v1152 = vrot.slane %v1151, 2
    %v1153 = vadd.f32 %v1151, %v1152
    %v1154 = vrot.slane %v1153, 1
    %v1155 = vadd.f32 %v1153, %v1154
    %v1156 = vld [vmem:[#allocation2] sm:$0x1]
    %1158 = vset.pattern.permute.xlu0 0
    %1159 = vperm.xlu0 %1158, %v1156
    %v1160 = vpop.permute.xlu0 %1159
    %v1162 = vlaneseq
    %v1163 = vshrl.u32 %v1162, 7
    %v1164 = vsub.s32 0, %v1163
    %v1165 = vrot.slane %v1160, %v1164
    %v1166 = vadd.f32 %v1092, %v1165
    %v1167 = vadd.f32 %v1113, %v1165
    %v1168 = vadd.f32 %v1134, %v1165
    %v1169 = vadd.f32 %v1155, %v1165
    %v1170 = vmul.f32 %v1166, 0.5
    %v1171 = vmul.f32 %v1167, 0.5
    %v1172 = vmul.f32 %v1168, 0.5
    %v1173 = vmul.f32 %v1169, 0.5
    %v1174 = vtanh.pop %v1170
    %v1175 = vtanh.pop %v1171
    %v1176 = vtanh.pop %v1172
    %v1177 = vtanh.pop %v1173
    %v1178 = vmul.f32 %v1174, 0.5
    %v1179 = vmul.f32 %v1175, 0.5
    %v1180 = vmul.f32 %v1176, 0.5
    %v1181 = vmul.f32 %v1177, 0.5
    %v1182 = vadd.f32 %v1178, 0.5
    %v1183 = vadd.f32 %v1179, 0.5
    %v1184 = vadd.f32 %v1180, 0.5
    %v1185 = vadd.f32 %v1181, 0.5
    %v1190 = vcombine.low %v1182, %v1183
    %v1191 = vcombine.low %v1184, %v1185
    %v1193 = vunpack.c.l.s4 1966171168
    %v1194 = vunpack.c.0.s8 %v1193
    %v1195 = vlaneseq
    %v1196 = vshrl.u32 %v1195, 7
    %v1197 = vsub.s32 %v1194, %v1196
    %v1198 = vrot.slane %v1190, %v1197
    %v1200 = vunpack.c.l.s4 1966171168
    %v1201 = vunpack.c.0.s8 %v1200
    %v1202 = vlaneseq
    %v1203 = vshrl.u32 %v1202, 7
    %v1204 = vsub.s32 %v1201, %v1203
    %v1205 = vrot.slane %v1191, %v1204
    %v1206 = vcombine.low %v1198, %v1205
    %v1208 = vunpack.c.l.s4 1966171168
    %v1209 = vunpack.c.0.s8 %v1208
    %v1210 = vlaneseq
    %v1211 = vshrl.u32 %v1210, 7
    %v1212 = vsub.s32 %v1209, %v1211
    %v1213 = vrot.slane %v1206, %v1212
    %v1215 = vlaneseq
    %vm1216 = vcmp.ge.s32.totalorder %v1215, 0
    %vm1217 = vcmp.lt.s32.totalorder %v1215, 512
    %vm1218 = vmand %vm1216, %vm1217
    %1219 = vst.msk [vmem:[#allocation3] sm:$0xf] %vm1218, %v1213
    // Predicated region
    $region38: #{tpu_custom_call.1} parent=1 // pred_check
      _
    $region39: #{tpu_custom_call.1} parent=1 // pred_check_branch
      %1221 = sbr.rel (0) target = $region41
    $region40: #{tpu_custom_call.1} parent=1 // pred_region
      %s1223 = ssub.s32 64, 64
      %1224 = vsyncadd [#allocation4], %s1223
      %s1226 = sshll.u32 [#allocation3], 4
      %s1227 = int_to_ptr.vmem [resolvable:$true] %s1226
      %1229 = dma.vmem_to_hbm [thread:$0]  %s1227, 64, %s9, [#allocation4]
    $region41: #{tpu_custom_call.1} parent=1 // pred_fallthru
      _
    // Predicated region
    $region42: #{tpu_custom_call.1} parent=1 // pred_check
      _
    $region43: #{tpu_custom_call.1} parent=1 // pred_check_branch
      %1231 = sbr.rel (0) target = $region45
    $region44: #{tpu_custom_call.1} parent=1 // pred_region
      %1232 = dma.done [#allocation4], 64
    $region45: #{tpu_custom_call.1} parent=1 // pred_fallthru
      _
    %1233 = vsyncpa [#allocation4], 1

</llo_original>
